<compile_context>
chip_gen: v7x
topology: tpu7x:2x2x1
jax: 0.10.0
libtpu: 0.0.40
codegen_flags: <defaults>
</compile_context>

<pallas_src>
import functools

import jax
import jax.numpy as jnp
from jax.experimental import pallas as pl
from jax.experimental.pallas import tpu as pltpu


_TARGET_BLOCK_BYTES = 4 << 20     # real (unpadded) x bytes per grid step (review: 2-4 MiB)
_MAX_TL = 32768                   # lane cap per block (multiple of 128)
_VPU_UNROLL_MAX_C = 8             # <= 8: unrolled VPU FMAs; above: MXU per-batch dots
_MXU_MAX_BATCH_UNROLL = 32        # cap static per-batch dot unroll in the MXU path


def _round_up(a: int, m: int) -> int:
    return ((a + m - 1) // m) * m


def _vmem_capacity_bytes() -> int:
    try:
        return int(pltpu.get_tpu_info().vmem_capacity_bytes)
    except Exception:
        return 64 << 20            # conservative fallback (v7x per-TensorCore VMEM)


def _conv1x1_kernel(w_ref, b_ref, x_ref, o_ref, *, use_vpu, compute_dtype):
    # w_ref: (C, C), b_ref: (C, 1) f32, x_ref / o_ref: (B_TILE, C, TL)
    w = w_ref[...]
    b = b_ref[...]                                        # (C, 1) float32
    if use_vpu:
        # Tiny C: C broadcast-FMAs on the VPU, accumulator seeded with the bias.
        # Exact f32 (v5e VPU has no bf16); at small C the op is HBM-bound so the
        # MXU buys nothing. Note: for C < 8 the (C, TL) slab pads to 8 sublanes;
        # the VMEM budget below accounts for that padded footprint.
        x = x_ref[...].astype(jnp.float32)
        wf = w.astype(jnp.float32)
        bt, c, tl = x.shape
        acc = jnp.broadcast_to(b[None, :, :], (bt, c, tl))     # hoisted, single broadcast
        for cc in range(c):                                     # static unroll over channels
            acc = acc + wf[:, cc:cc + 1][None, :, :] * x[:, cc:cc + 1, :]
        o_ref[...] = acc.astype(o_ref.dtype)
    else:
        # Larger C: per-batch 2-D (C,C) @ (C,TL) MXU dots with f32 accumulation.
        # (A 3-D einsum would lower to dot_general + a transpose back to (b, o, l);
        #  per-batch 2-D dots feed the MXU directly and store lane-dense.)
        bt = x_ref.shape[0]
        for bi in range(bt):                                    # static unroll (<= 32)
            xb = x_ref[bi].astype(compute_dtype)                # (C, TL)
            yb = jnp.dot(w, xb, preferred_element_type=jnp.float32)
            o_ref[bi] = (yb + b).astype(o_ref.dtype)


def invertible_conv1x1(x, weight, bias, *, compute_dtype=None):
    """1x1 Conv1d forward:  y[n, o, l] = sum_c W[o, c] * x[n, c, l] + b[o].

    x: (N, C, L), weight: (C, C), bias: (C,).  Returns (N, C, L) in x.dtype.
    """
    n, c, l = x.shape
    out_dtype = x.dtype
    cdt = jnp.dtype(compute_dtype) if compute_dtype is not None else jnp.dtype(x.dtype)
    x_itemsize = jnp.dtype(x.dtype).itemsize            # x streams in its HBM dtype
    use_vpu = c <= _VPU_UNROLL_MAX_C

    # ---- generation-aware VMEM budget --------------------------------------
    vmem_cap = _vmem_capacity_bytes()
    c_sub = _round_up(c, 8)                              # sublane-padded channel rows
    w_res_bytes = _round_up(c, 8) * _round_up(c, 128) * cdt.itemsize
    b_res_bytes = _round_up(c, 8) * 128 * 4
    # Budget for the double-buffered x / y streams; leave room for (double-buffered)
    # resident W / bias plus slack.
    stream_budget = (vmem_cap * 3) // 8
    stream_budget = min(stream_budget, vmem_cap - 2 * (w_res_bytes + b_res_bytes) - (4 << 20))
    stream_budget = max(stream_budget, 4 << 20)
    block_cap = stream_budget // 4                       # x + y, each double-buffered

    # ---- lane tile: lane-dense, as big as the budget / L allows ------------
    tl = min(_round_up(l, 128), _MAX_TL)
    tl = min(tl, max(128, (block_cap // (c_sub * x_itemsize)) // 128 * 128))

    # ---- batch tile: aim for ~_TARGET_BLOCK_BYTES of real x per step -------
    slab = c * tl * x_itemsize                           # real bytes per batch element
    by_vmem = max(1, block_cap // (c_sub * tl * x_itemsize))
    by_target = max(1, (_TARGET_BLOCK_BYTES + slab - 1) // slab)
    b_tile = min(n, by_vmem, by_target)                  # no n % b_tile == 0 requirement
    if not use_vpu:
        b_tile = min(b_tile, _MXU_MAX_BATCH_UNROLL)

    # ---- keep >= 2 grid steps on a parallel axis (v7x has 2 TensorCores) ---
    if n * c * l * x_itemsize >= (4 << 20):
        if pl.cdiv(n, b_tile) * pl.cdiv(l, tl) < 2:
            if n >= 2:
                b_tile = (n + 1) // 2
            elif l > 128:
                tl = max(128, _round_up(pl.cdiv(l, 2), 128))

    grid = (pl.cdiv(n, b_tile), pl.cdiv(l, tl))

    # ---- operands: only W / bias are recast in the wrapper (tiny) ----------
    w2d = weight.astype(cdt)
    b2d = bias.reshape(c, 1).astype(jnp.float32)

    kernel = functools.partial(_conv1x1_kernel, use_vpu=use_vpu, compute_dtype=cdt)

    # ---- compiler params: megacore sharding + VMEM limit when needed -------
    block_bytes = b_tile * c_sub * tl * x_itemsize       # padded VMEM footprint per buffer
    vmem_est = 4 * block_bytes + 2 * (w_res_bytes + b_res_bytes) + (1 << 20)
    cp_kwargs = dict(dimension_semantics=("parallel", "parallel"))
    if vmem_est > (16 << 20):                             # may exceed smallest scoped default
        cp_kwargs["vmem_limit_bytes"] = int(min(vmem_cap - (2 << 20), vmem_est + (4 << 20)))

    # TODO(synk): if profiling shows exposed DMA waits on v5e/v6e, add
    #             pipeline_mode=pl.Buffered(3) on the x / out BlockSpecs (keep 2 on v7x).
    return pl.pallas_call(
        kernel,
        out_shape=jax.ShapeDtypeStruct((n, c, l), out_dtype),
        grid_spec=pltpu.PrefetchScalarGridSpec(
            num_scalar_prefetch=0,
            grid=grid,
            in_specs=[
                pl.BlockSpec((c, c), lambda i, j: (0, 0)),              # W (resident)
                pl.BlockSpec((c, 1), lambda i, j: (0, 0)),              # bias (resident)
                pl.BlockSpec((b_tile, c, tl), lambda i, j: (i, 0, j)),  # x tile
            ],
            out_specs=pl.BlockSpec((b_tile, c, tl), lambda i, j: (i, 0, j)),
        ),
        compiler_params=pltpu.CompilerParams(**cp_kwargs),
    )(w2d, b2d, x)


def _orthogonal_init(key, dim):
    # Deterministic orthogonal matrix via QR (mirrors nn.init.orthogonal_).
    a = jax.random.normal(key, (dim, dim), dtype=jnp.float32)
    q, r = jnp.linalg.qr(a)
    return q * jnp.sign(jnp.diag(r))[None, :]


def _reference(x, weight, bias):
    # Exact f32 reference (elementwise multiply + reduce; no MXU precision ambiguity).
    return (weight[None, :, :, None] * x[:, None, :, :]).sum(axis=2) + bias[None, :, None]


if __name__ == "__main__":
    key = jax.random.PRNGKey(0)
    k_w, k_x, k_x2 = jax.random.split(key, 3)

    # InvertibleConv1x1(input_dim=4) applied to (batch=2, channels=4, length=16).
    N, C, L = 2, 4, 16
    weight = _orthogonal_init(k_w, C)             # conv.weight (C, C, 1) -> (C, C), orthogonal
    bias = jnp.zeros((C,), dtype=jnp.float32)     # conv.bias zero-init
    x = jax.random.normal(k_x, (N, C, L), dtype=jnp.float32)

    y = jax.block_until_ready(invertible_conv1x1(x, weight, bias))
    assert y.shape == (N, C, L)
    assert jnp.allclose(y, _reference(x, weight, bias), atol=1e-5, rtol=1e-5), "mismatch"

    # Ragged shapes (L not a multiple of 128): exercises the masked edge tile that
    # replaced the old full-tensor pad + output slice.
    N2, L2 = 3, 300
    x2 = jax.random.normal(k_x2, (N2, C, L2), dtype=jnp.float32)
    y2 = jax.block_until_ready(invertible_conv1x1(x2, weight, bias))
    assert y2.shape == (N2, C, L2)
    assert jnp.allclose(y2, _reference(x2, weight, bias), atol=1e-5, rtol=1e-5), "mismatch"

    print("KERNEL_OK")
</pallas_src>

<mosaic_0001>
module attributes {stable_mosaic.version = 11 : i64} {
  func.func @_conv1x1_kernel(%arg0: i32, %arg1: i32, %arg2: memref<4x4xf32, #tpu.memory_space<vmem>>, %arg3: memref<4x1xf32, #tpu.memory_space<vmem>>, %arg4: memref<2x4x128xf32, #tpu.memory_space<vmem>>, %arg5: memref<2x4x128xf32, #tpu.memory_space<vmem>>) attributes {dimension_semantics = [#tpu.dimension_semantics<parallel>, #tpu.dimension_semantics<parallel>], iteration_bounds = array<i64: 1, 1>, scalar_prefetch = 0 : i64, scratch_operands = 0 : i64, tpu.core_type = #tpu.core_type<tc>, window_params = [{pipeline_mode = #tpu.pipeline_mode<synchronous>, transform_indices = @transform_0, window_bounds = array<i64: 4, 4>}, {pipeline_mode = #tpu.pipeline_mode<synchronous>, transform_indices = @transform_1, window_bounds = array<i64: 4, 1>}, {transform_indices = @transform_2, window_bounds = array<i64: 2, 4, 128>}, {transform_indices = @transform_3, window_bounds = array<i64: 2, 4, 128>}]} {
    %c0 = arith.constant 0 : index
    %c0_0 = arith.constant 0 : index
    %0 = vector.load %arg2[%c0, %c0_0] : memref<4x4xf32, #tpu.memory_space<vmem>>, vector<4x4xf32>
    %c0_1 = arith.constant 0 : index
    %c0_2 = arith.constant 0 : index
    %1 = vector.load %arg3[%c0_1, %c0_2] : memref<4x1xf32, #tpu.memory_space<vmem>>, vector<4x1xf32>
    %c0_3 = arith.constant 0 : index
    %c0_4 = arith.constant 0 : index
    %c0_5 = arith.constant 0 : index
    %2 = vector.load %arg4[%c0_3, %c0_4, %c0_5] : memref<2x4x128xf32, #tpu.memory_space<vmem>>, vector<2x4x128xf32>
    %3 = vector.shape_cast %1 : vector<4x1xf32> to vector<1x4x1xf32>
    %4 = vector.shape_cast %3 : vector<1x4x1xf32> to vector<1x4x1xf32>
    %5 = vector.broadcast %4 : vector<1x4x1xf32> to vector<2x4x128xf32>
    %6 = vector.extract_strided_slice %0 {offsets = [0, 0], sizes = [4, 1], strides = [1, 1]} : vector<4x4xf32> to vector<4x1xf32>
    %7 = vector.shape_cast %6 : vector<4x1xf32> to vector<1x4x1xf32>
    %8 = vector.extract_strided_slice %2 {offsets = [0, 0, 0], sizes = [2, 1, 128], strides = [1, 1, 1]} : vector<2x4x128xf32> to vector<2x1x128xf32>
    %9 = vector.broadcast %7 : vector<1x4x1xf32> to vector<2x4x128xf32>
    %10 = vector.broadcast %8 : vector<2x1x128xf32> to vector<2x4x128xf32>
    %11 = arith.mulf %9, %10 : vector<2x4x128xf32>
    %12 = arith.addf %5, %11 : vector<2x4x128xf32>
    %13 = vector.extract_strided_slice %0 {offsets = [0, 1], sizes = [4, 1], strides = [1, 1]} : vector<4x4xf32> to vector<4x1xf32>
    %14 = vector.shape_cast %13 : vector<4x1xf32> to vector<1x4x1xf32>
    %15 = vector.extract_strided_slice %2 {offsets = [0, 1, 0], sizes = [2, 1, 128], strides = [1, 1, 1]} : vector<2x4x128xf32> to vector<2x1x128xf32>
    %16 = vector.broadcast %14 : vector<1x4x1xf32> to vector<2x4x128xf32>
    %17 = vector.broadcast %15 : vector<2x1x128xf32> to vector<2x4x128xf32>
    %18 = arith.mulf %16, %17 : vector<2x4x128xf32>
    %19 = arith.addf %12, %18 : vector<2x4x128xf32>
    %20 = vector.extract_strided_slice %0 {offsets = [0, 2], sizes = [4, 1], strides = [1, 1]} : vector<4x4xf32> to vector<4x1xf32>
    %21 = vector.shape_cast %20 : vector<4x1xf32> to vector<1x4x1xf32>
    %22 = vector.extract_strided_slice %2 {offsets = [0, 2, 0], sizes = [2, 1, 128], strides = [1, 1, 1]} : vector<2x4x128xf32> to vector<2x1x128xf32>
    %23 = vector.broadcast %21 : vector<1x4x1xf32> to vector<2x4x128xf32>
    %24 = vector.broadcast %22 : vector<2x1x128xf32> to vector<2x4x128xf32>
    %25 = arith.mulf %23, %24 : vector<2x4x128xf32>
    %26 = arith.addf %19, %25 : vector<2x4x128xf32>
    %27 = vector.extract_strided_slice %0 {offsets = [0, 3], sizes = [4, 1], strides = [1, 1]} : vector<4x4xf32> to vector<4x1xf32>
    %28 = vector.shape_cast %27 : vector<4x1xf32> to vector<1x4x1xf32>
    %29 = vector.extract_strided_slice %2 {offsets = [0, 3, 0], sizes = [2, 1, 128], strides = [1, 1, 1]} : vector<2x4x128xf32> to vector<2x1x128xf32>
    %30 = vector.broadcast %28 : vector<1x4x1xf32> to vector<2x4x128xf32>
    %31 = vector.broadcast %29 : vector<2x1x128xf32> to vector<2x4x128xf32>
    %32 = arith.mulf %30, %31 : vector<2x4x128xf32>
    %33 = arith.addf %26, %32 : vector<2x4x128xf32>
    %c0_6 = arith.constant 0 : index
    %c0_7 = arith.constant 0 : index
    %c0_8 = arith.constant 0 : index
    %34 = vector.load %arg5[%c0_6, %c0_7, %c0_8] : memref<2x4x128xf32, #tpu.memory_space<vmem>>, vector<2x4x128xf32>
    tpu.vector_store %arg5[%c0_6, %c0_7, %c0_8], %33 {strides = array<i32>} : memref<2x4x128xf32, #tpu.memory_space<vmem>>, vector<2x4x128xf32>,
    return
  }
  func.func @transform_0(%arg0: i32, %arg1: i32) -> (i32, i32) {
    %c0_i32 = arith.constant 0 : i32
    %c0_i32_0 = arith.constant 0 : i32
    %c0_i32_1 = arith.constant 0 : i32
    return %c0_i32, %c0_i32_0 : i32, i32
  }
  func.func @transform_1(%arg0: i32, %arg1: i32) -> (i32, i32) {
    %c0_i32 = arith.constant 0 : i32
    %c0_i32_0 = arith.constant 0 : i32
    %c0_i32_1 = arith.constant 0 : i32
    return %c0_i32, %c0_i32_0 : i32, i32
  }
  func.func @transform_2(%arg0: i32, %arg1: i32) -> (i32, i32, i32) {
    %c0_i32 = arith.constant 0 : i32
    %c0_i32_0 = arith.constant 0 : i32
    return %arg0, %c0_i32, %arg1 : i32, i32, i32
  }
  func.func @transform_3(%arg0: i32, %arg1: i32) -> (i32, i32, i32) {
    %c0_i32 = arith.constant 0 : i32
    %c0_i32_0 = arith.constant 0 : i32
    return %arg0, %c0_i32, %arg1 : i32, i32, i32
  }
}

</mosaic_0001>

<llo_original>
// kernel: tpu_custom_call.1
$region0: #{tpu_custom_call.1}
  #allocation0 [shape = 'u32[]', space=smem, size = 0x4, offset = 0x4, fixed_abs, tag = 'smem constant byte address 0x4 - core index']
  #allocation1 [shape = 'u32[144,128]{1,0:T(1,128)}', space=vmem, size = 0x12000, scoped, tag = 'internal scratch']
  %s0 = inlined_call_operand.vmem [shape: f32[4,4], index: 0, kind: input, shape index: {}]
  %s1 = inlined_call_operand.vmem [shape: f32[4,1], index: 1, kind: input, shape index: {}]
  %s2 = inlined_call_operand.vmem [shape: f32[2,4,16], index: 2, kind: input, shape index: {}]
  %s3 = inlined_call_operand.hbm [shape: f32[2,4,16], index: 3, kind: output, shape index: {}]
  %s4 = sld [smem:[#allocation0]]
  $region22: #{tpu_custom_call.1} parent=0
    _
  %s6 = ssub.s32 1, %s4
  %s7 = scalar_select 0, %s6, %s4
  $region1: #{tpu_custom_call.1} parent=0
    #allocation2 [shape = 'u8[4096]{0}', space=vmem, size = 0x1000, scoped, tag = 'output window, operand 0, single buffered']
    #allocation3 [shape = 's32[1]{0}', space=sflag, size = 0x4, scoped, tag = 'scoped memory for tpu_custom_call.1']
    %8 = vsyncpa [#allocation3], 0
    // Predicated region
    $region2: #{tpu_custom_call.1} parent=1 // pred_check
      _
    $region3: #{tpu_custom_call.1} parent=1 // pred_check_branch
      %10 = sbr.rel (0) target = $region5
    $region4: #{tpu_custom_call.1} parent=1 // pred_region
      _
    $region5: #{tpu_custom_call.1} parent=1 // pred_fallthru
      _
    // Predicated region
    $region6: #{tpu_custom_call.1} parent=1 // pred_check
      _
    $region7: #{tpu_custom_call.1} parent=1 // pred_check_branch
      %12 = sbr.rel (0) target = $region9
    $region8: #{tpu_custom_call.1} parent=1 // pred_region
      _
    $region9: #{tpu_custom_call.1} parent=1 // pred_fallthru
      _
    // Predicated region
    $region10: #{tpu_custom_call.1} parent=1 // pred_check
      _
    $region11: #{tpu_custom_call.1} parent=1 // pred_check_branch
      %14 = sbr.rel (0) target = $region13
    $region12: #{tpu_custom_call.1} parent=1 // pred_region
      _
    $region13: #{tpu_custom_call.1} parent=1 // pred_fallthru
      _
    %v15 = vld [vmem:[%s0] sm:$0xf]
    %v16 = vld [vmem:[%s1] sm:$0xf]
    %v17 = vld [vmem:[%s2] sm:$0xf]
    %v18 = vld [vmem:[%s2 + $0x4] sm:$0xf]
    %20 = vset.pattern.permute.xlu0 0
    %21 = vperm.xlu0 %20, %v16
    %v22 = vpop.permute.xlu0 %21
    %25 = vset.pattern.permute.xlu0 0
    %26 = vperm.xlu0 %25, %v15
    %v27 = vpop.permute.xlu0 %26
    %v29 = vlaneseq
    %v30 = vshrl.u32 %v29, 7
    %v31 = vsub.s32 0, %v30
    %v32 = vrot.slane %v17, %v31
    %v33 = vlaneseq
    %v34 = vshrl.u32 %v33, 7
    %v35 = vsub.s32 0, %v34
    %v36 = vrot.slane %v18, %v35
    %v37 = vmul.f32 %v27, %v32
    %v38 = vmul.f32 %v27, %v36
    %v39 = vadd.f32 %v22, %v37
    %v40 = vadd.f32 %v22, %v38
    %41 = vset.pattern.permute.xlu0 1
    %42 = vperm.xlu0 %41, %v15
    %v43 = vpop.permute.xlu0 %42
    %v45 = vlaneseq
    %v46 = vshrl.u32 %v45, 7
    %v47 = vsub.s32 1, %v46
    %v48 = vrot.slane %v17, %v47
    %v49 = vlaneseq
    %v50 = vshrl.u32 %v49, 7
    %v51 = vsub.s32 1, %v50
    %v52 = vrot.slane %v18, %v51
    %v53 = vmul.f32 %v43, %v48
    %v54 = vmul.f32 %v43, %v52
    %v55 = vadd.f32 %v39, %v53
    %v56 = vadd.f32 %v40, %v54
    %57 = vset.pattern.permute.xlu0 2
    %58 = vperm.xlu0 %57, %v15
    %v59 = vpop.permute.xlu0 %58
    %v61 = vlaneseq
    %v62 = vshrl.u32 %v61, 7
    %v63 = vsub.s32 2, %v62
    %v64 = vrot.slane %v17, %v63
    %v65 = vlaneseq
    %v66 = vshrl.u32 %v65, 7
    %v67 = vsub.s32 2, %v66
    %v68 = vrot.slane %v18, %v67
    %v69 = vmul.f32 %v59, %v64
    %v70 = vmul.f32 %v59, %v68
    %v71 = vadd.f32 %v55, %v69
    %v72 = vadd.f32 %v56, %v70
    %73 = vset.pattern.permute.xlu0 3
    %74 = vperm.xlu0 %73, %v15
    %v75 = vpop.permute.xlu0 %74
    %v77 = vlaneseq
    %v78 = vshrl.u32 %v77, 7
    %v79 = vsub.s32 3, %v78
    %v80 = vrot.slane %v17, %v79
    %v81 = vlaneseq
    %v82 = vshrl.u32 %v81, 7
    %v83 = vsub.s32 3, %v82
    %v84 = vrot.slane %v18, %v83
    %v85 = vmul.f32 %v75, %v80
    %v86 = vmul.f32 %v75, %v84
    %v87 = vadd.f32 %v71, %v85
    %v88 = vadd.f32 %v72, %v86
    %89 = vst [vmem:[#allocation2] sm:$0xf] %v87
    %90 = vst [vmem:[#allocation2 + $0x4] sm:$0xf] %v88
    // Predicated region
    $region14: #{tpu_custom_call.1} parent=1 // pred_check
      _
    $region15: #{tpu_custom_call.1} parent=1 // pred_check_branch
      %92 = sbr.rel (0) target = $region17
    $region16: #{tpu_custom_call.1} parent=1 // pred_region
      %s94 = ssub.s32 128, 128
      %95 = vsyncadd [#allocation3], %s94
      %s96 = sshll.u32 [#allocation2], 4
      %s97 = int_to_ptr.vmem [resolvable:$true] %s96
      %102 = dma.vmem_to_hbm [thread:$0]  %s97, 128, %s3, [#allocation3], 64, 64, 4
    $region17: #{tpu_custom_call.1} parent=1 // pred_fallthru
      _
    // Predicated region
    $region18: #{tpu_custom_call.1} parent=1 // pred_check
      _
    $region19: #{tpu_custom_call.1} parent=1 // pred_check_branch
      %104 = sbr.rel (0) target = $region21
    $region20: #{tpu_custom_call.1} parent=1 // pred_region
      %105 = dma.done [#allocation3], 128
    $region21: #{tpu_custom_call.1} parent=1 // pred_fallthru
      _
    %106 = vsyncpa [#allocation3], 1

</llo_original>
